<compile_context>
chip_gen: v5e
topology: v5e:2x2
jax: 0.10.0
libtpu: 0.0.40
codegen_flags: <defaults>
</compile_context>

<pallas_src>
import functools
import math

import jax
import jax.numpy as jnp
from jax.experimental import pallas as pl
from jax.experimental.pallas import tpu as pltpu


def _round_up(x, m):
    return (x + m - 1) // m * m


def _vmem_capacity_bytes():
    """Per-core physical VMEM; conservative (v7x-safe) fallback on failure."""
    try:
        cap = int(pltpu.get_tpu_info().vmem_capacity_bytes)
        if cap > 0:
            return cap
    except Exception:
        pass
    return 64 << 20


def _pick_tiles(M, D_pad, inner, xb, wb, budget, row_align):
    """Choose (mode, tm, tn, inner_pad, vmem_need) within the VMEM budget."""
    tm_cands = [t for t in (1024, 768, 512, 384, 256, 128, 64, 32, 16, 8)
                if t >= row_align]
    m_cap = _round_up(M, row_align)

    # ---- resident-weights fast path: weights fetched from HBM exactly once.
    inner_res = _round_up(inner, 256 if inner > 128 else 128)
    w_bytes = 2 * D_pad * inner_res * wb              # W1 + W2
    bias_bytes = (inner_res + D_pad) * wb
    if 2 * (w_bytes + bias_bytes) <= budget // 2:
        for tm in tm_cands:
            tm_c = min(tm, m_cap)
            need = 4 * tm_c * D_pad * xb + 2 * (w_bytes + bias_bytes)
            if need <= budget:
                return "resident", tm_c, inner_res, inner_res, need

    # ---- streamed path: W1/W2 stream in (D_pad, tn)/(tn, D_pad) tiles.
    best = None
    for tm in tm_cands:
        tm_c = min(tm, m_cap)
        for tn in (1024, 512, 256, 128):
            tn_c = min(tn, _round_up(inner, 128))
            inner_p = _round_up(inner, tn_c)
            need = (4 * tm_c * D_pad * xb              # x + out (double-buffered)
                    + 4 * tn_c * D_pad * wb            # W1 + W2 tiles (double-buffered)
                    + 2 * (inner_p * 4 + D_pad * wb)   # resident b1 (f32) + b2
                    + tm_c * D_pad * 4)                # f32 accumulator scratch
            if need > budget:
                continue
            # per-row cost: weight re-stream from HBM (dominant) + f32 acc
            # read-modify-write traffic in VMEM (~10x HBM bandwidth).
            score = (2.0 * wb) / tm_c + 8.0 / (10.0 * tn_c)
            if best is None or score < best[0] or (score == best[0]
                                                   and tm_c > best[1]):
                best = (score, tm_c, tn_c, inner_p, need)
    if best is not None:
        return ("stream",) + best[1:]

    # Smallest tiles even if nominally over budget (let the compiler try).
    tn_c = min(128, _round_up(inner, 128))
    return "stream", min(row_align, m_cap), tn_c, _round_up(inner, tn_c), budget


def ffn_resident_kernel(x_ref, w1_ref, b1_ref, w2_ref, b2_ref, o_ref):
    """Whole FFN for one (tm, D_pad) row tile; weights stay VMEM-resident."""
    h = jnp.dot(x_ref[...], w1_ref[...], preferred_element_type=jnp.float32)
    h = jnp.maximum(h + b1_ref[...].astype(jnp.float32), 0.0)
    o = jnp.dot(h.astype(w2_ref.dtype), w2_ref[...],
                preferred_element_type=jnp.float32)
    o_ref[...] = (o + b2_ref[...].astype(jnp.float32)).astype(o_ref.dtype)


def ffn_stream_kernel(x_ref, w1_ref, b1_ref, w2_ref, b2_ref, o_ref, acc_ref):
    """One (tm, D_pad) row tile of x, one tn-wide slice j of the inner dim."""
    j = pl.program_id(1)

    # h_j = relu(x @ W1[:, j] + b1[j])                         -- (tm, tn)
    h = jnp.dot(x_ref[...], w1_ref[...], preferred_element_type=jnp.float32)
    h = jnp.maximum(h + b1_ref[pl.ds(j, 1), :].astype(jnp.float32), 0.0)

    # Contribution of this inner slice to the output           -- (tm, D_pad)
    contrib = jnp.dot(h.astype(w2_ref.dtype), w2_ref[...],
                      preferred_element_type=jnp.float32)

    # b2 folded into the first write: no separate accumulator-init pass.
    @pl.when(j == 0)
    def _():
        acc_ref[...] = contrib + b2_ref[...].astype(jnp.float32)

    @pl.when(j > 0)
    def _():
        acc_ref[...] += contrib

    @pl.when(j == pl.num_programs(1) - 1)
    def _():
        o_ref[...] = acc_ref[...].astype(o_ref.dtype)


@functools.partial(jax.jit, static_argnames=("tm", "tn"))
def feed_forward(x, w1, b1, w2, b2, *, tm=None, tn=None):
    """x: (B, S, D).  w1: (D, 4D), b1: (4D,), w2: (4D, D), b2: (D,).

    Weights are stored transposed vs. PyTorch ((in_features, out_features)).
    Eval-mode forward (dropout == identity).  tm/tn override auto-tiling.
    """
    B, S, D = x.shape
    inner = w1.shape[1]
    M = B * S

    xb = jnp.dtype(x.dtype).itemsize
    wb = jnp.dtype(w1.dtype).itemsize
    row_align = max(8, 32 // xb)                      # sublane pack for x dtype
    # 256-multiple padding above 128 keeps the 2x256x256 MXUs (v6e/v7x) full.
    D_pad = _round_up(D, 128) if D <= 128 else _round_up(D, 256)

    cap = _vmem_capacity_bytes()
    budget = int(cap * 3) // 4                        # headroom for compiler scratch

    if tm is None or tn is None:
        mode, tm_eff, tn_eff, inner_pad, need = _pick_tiles(
            M, D_pad, inner, xb, wb, budget, row_align)
    else:
        mode = "stream"
        tm_eff = min(_round_up(tm, row_align), _round_up(M, row_align))
        tn_eff = min(_round_up(tn, 128), _round_up(inner, 128))
        inner_pad = _round_up(inner, tn_eff)
        need = (4 * tm_eff * D_pad * xb + 4 * tn_eff * D_pad * wb
                + 2 * (inner_pad * 4 + D_pad * wb) + tm_eff * D_pad * 4)

    M_pad = _round_up(M, tm_eff)
    vmem_limit = int(min(cap * 15 // 16, max(int(need * 1.25), 32 << 20)))

    # ---- lane/sublane-friendly zero padding (mathematically a no-op) -------
    x2 = jnp.pad(x.reshape(M, D), ((0, M_pad - M), (0, D_pad - D)))
    w1p = jnp.pad(w1, ((0, D_pad - D), (0, inner_pad - inner)))
    w2p = jnp.pad(w2, ((0, inner_pad - inner), (0, D_pad - D)))
    b2p = jnp.pad(b2.reshape(1, D), ((0, 0), (0, D_pad - D)))

    flops = 4 * M_pad * D_pad * inner_pad             # two matmuls, 2 flops/MAC

    if mode == "resident":
        b1p = jnp.pad(b1.reshape(1, inner), ((0, 0), (0, inner_pad - inner)))
        bytes_accessed = (2 * M_pad * D_pad * xb
                          + 2 * D_pad * inner_pad * wb
                          + (inner_pad + D_pad) * wb)
        out2 = pl.pallas_call(
            ffn_resident_kernel,
            out_shape=jax.ShapeDtypeStruct((M_pad, D_pad), x.dtype),
            grid_spec=pltpu.PrefetchScalarGridSpec(
                num_scalar_prefetch=0,
                grid=(M_pad // tm_eff,),
                in_specs=[
                    pl.BlockSpec((tm_eff, D_pad), lambda i: (i, 0)),      # x rows
                    pl.BlockSpec((D_pad, inner_pad), lambda i: (0, 0)),   # W1 resident
                    pl.BlockSpec((1, inner_pad), lambda i: (0, 0)),       # b1 resident
                    pl.BlockSpec((inner_pad, D_pad), lambda i: (0, 0)),   # W2 resident
                    pl.BlockSpec((1, D_pad), lambda i: (0, 0)),           # b2 resident
                ],
                out_specs=pl.BlockSpec((tm_eff, D_pad), lambda i: (i, 0)),
            ),
            compiler_params=pltpu.CompilerParams(
                dimension_semantics=("parallel",),
                vmem_limit_bytes=vmem_limit,
            ),
            cost_estimate=pl.CostEstimate(
                flops=flops, transcendentals=0, bytes_accessed=bytes_accessed),
        )(x2, w1p, b1p, w2p, b2p)
    else:
        n_j = inner_pad // tn_eff
        # b1 stays fully resident (f32 for a packing-free dynamic row slice).
        b1p = jnp.pad(b1.astype(jnp.float32),
                      ((0, inner_pad - inner),)).reshape(n_j, tn_eff)
        bytes_accessed = (2 * M_pad * D_pad * xb
                          + (M_pad // tm_eff) * 2 * D_pad * inner_pad * wb
                          + inner_pad * 4 + D_pad * wb)
        out2 = pl.pallas_call(
            ffn_stream_kernel,
            out_shape=jax.ShapeDtypeStruct((M_pad, D_pad), x.dtype),
            grid_spec=pltpu.PrefetchScalarGridSpec(
                num_scalar_prefetch=0,
                grid=(M_pad // tm_eff, n_j),
                in_specs=[
                    pl.BlockSpec((tm_eff, D_pad), lambda i, j: (i, 0)),   # x rows
                    pl.BlockSpec((D_pad, tn_eff), lambda i, j: (0, j)),   # W1 tile
                    pl.BlockSpec((n_j, tn_eff), lambda i, j: (0, 0)),     # b1 resident
                    pl.BlockSpec((tn_eff, D_pad), lambda i, j: (j, 0)),   # W2 tile
                    pl.BlockSpec((1, D_pad), lambda i, j: (0, 0)),        # b2 resident
                ],
                # Same output block across the reduction axis j -> stays resident.
                out_specs=pl.BlockSpec((tm_eff, D_pad), lambda i, j: (i, 0)),
                scratch_shapes=[pltpu.VMEM((tm_eff, D_pad), jnp.float32)],
            ),
            compiler_params=pltpu.CompilerParams(
                dimension_semantics=("parallel", "arbitrary"),
                vmem_limit_bytes=vmem_limit,
            ),
            cost_estimate=pl.CostEstimate(
                flops=flops, transcendentals=0, bytes_accessed=bytes_accessed),
        )(x2, w1p, b1p, w2p, b2p)

    return out2[:M, :D].reshape(B, S, D)


def init_params(key, in_dim, dtype=jnp.float32):
    """Deterministic init mirroring nn.Linear (uniform +-1/sqrt(fan_in)).

    Weights are stored transposed vs. PyTorch: (in_features, out_features).
    """
    inner_dim = in_dim * 4
    k1, k2, k3, k4 = jax.random.split(key, 4)
    bound1 = 1.0 / math.sqrt(in_dim)
    bound2 = 1.0 / math.sqrt(inner_dim)
    w1 = jax.random.uniform(k1, (in_dim, inner_dim), jnp.float32, -bound1, bound1)
    b1 = jax.random.uniform(k2, (inner_dim,), jnp.float32, -bound1, bound1)
    w2 = jax.random.uniform(k3, (inner_dim, in_dim), jnp.float32, -bound2, bound2)
    b2 = jax.random.uniform(k4, (in_dim,), jnp.float32, -bound2, bound2)
    return (w1.astype(dtype), b1.astype(dtype),
            w2.astype(dtype), b2.astype(dtype))


if __name__ == "__main__":
    key = jax.random.PRNGKey(0)
    k_x, k_p, k_x2, k_p2 = jax.random.split(key, 4)

    # Small shapes consistent with the module: batch=2, seq=8, hidden=32.
    B, S, D = 2, 8, 32
    x = jax.random.normal(k_x, (B, S, D), jnp.float32)
    w1, b1, w2, b2 = init_params(k_p, D)
    ref = jnp.maximum(x @ w1 + b1, 0.0) @ w2 + b2

    # 1) Auto-tiled path (small D -> resident-weights fast path), f32.
    out = jax.block_until_ready(feed_forward(x, w1, b1, w2, b2))
    assert out.shape == (B, S, D)
    assert jnp.allclose(out, ref, atol=1e-4, rtol=1e-4)

    # 2) bf16 weights/activations (preferred perf path), f32 accumulation.
    xb16 = x.astype(jnp.bfloat16)
    w1b, b1b, w2b, b2b = (t.astype(jnp.bfloat16) for t in (w1, b1, w2, b2))
    outb = jax.block_until_ready(feed_forward(xb16, w1b, b1b, w2b, b2b))
    assert jnp.allclose(outb.astype(jnp.float32), ref, atol=1e-1, rtol=1e-1)

    # 3) Explicitly exercise the streamed (inner-dim reduction) path.
    D2 = 64
    x2 = jax.random.normal(k_x2, (B, S, D2), jnp.float32)
    w1c, b1c, w2c, b2c = init_params(k_p2, D2)
    ref2 = jnp.maximum(x2 @ w1c + b1c, 0.0) @ w2c + b2c
    out2 = jax.block_until_ready(
        feed_forward(x2, w1c, b1c, w2c, b2c, tm=16, tn=128))
    assert jnp.allclose(out2, ref2, atol=1e-4, rtol=1e-4)

    print("KERNEL_OK")
</pallas_src>

<mosaic_0001>
module attributes {stable_mosaic.version = 11 : i64} {
  func.func @ffn_resident_kernel(%arg0: i32, %arg1: memref<16x128xf32, #tpu.memory_space<vmem>>, %arg2: memref<128x128xf32, #tpu.memory_space<vmem>>, %arg3: memref<1x128xf32, #tpu.memory_space<vmem>>, %arg4: memref<128x128xf32, #tpu.memory_space<vmem>>, %arg5: memref<1x128xf32, #tpu.memory_space<vmem>>, %arg6: memref<16x128xf32, #tpu.memory_space<vmem>>) attributes {dimension_semantics = [#tpu.dimension_semantics<parallel>], iteration_bounds = array<i64: 1>, scalar_prefetch = 0 : i64, scratch_operands = 0 : i64, tpu.core_type = #tpu.core_type<tc>, window_params = [{transform_indices = @transform_0, window_bounds = array<i64: 16, 128>}, {pipeline_mode = #tpu.pipeline_mode<synchronous>, transform_indices = @transform_1, window_bounds = array<i64: 128, 128>}, {pipeline_mode = #tpu.pipeline_mode<synchronous>, transform_indices = @transform_2, window_bounds = array<i64: 1, 128>}, {pipeline_mode = #tpu.pipeline_mode<synchronous>, transform_indices = @transform_3, window_bounds = array<i64: 128, 128>}, {pipeline_mode = #tpu.pipeline_mode<synchronous>, transform_indices = @transform_4, window_bounds = array<i64: 1, 128>}, {transform_indices = @transform_5, window_bounds = array<i64: 16, 128>}]} {
    %c0 = arith.constant 0 : index
    %c0_0 = arith.constant 0 : index
    %0 = vector.load %arg1[%c0, %c0_0] : memref<16x128xf32, #tpu.memory_space<vmem>>, vector<16x128xf32>
    %c0_1 = arith.constant 0 : index
    %c0_2 = arith.constant 0 : index
    %1 = vector.load %arg2[%c0_1, %c0_2] : memref<128x128xf32, #tpu.memory_space<vmem>>, vector<128x128xf32>
    %cst = arith.constant dense<0.000000e+00> : vector<16x128xf32>
    %2 = tpu.matmul %0, %1, %cst {dimension_numbers = #tpu.dot_dimension_numbers<[1], [0], [0], [1], [0, 0, 1, 1], [], []>} : vector<16x128xf32>, vector<128x128xf32>, vector<16x128xf32> -> vector<16x128xf32>
    %c0_3 = arith.constant 0 : index
    %c0_4 = arith.constant 0 : index
    %3 = vector.load %arg3[%c0_3, %c0_4] : memref<1x128xf32, #tpu.memory_space<vmem>>, vector<1x128xf32>
    %4 = vector.broadcast %3 : vector<1x128xf32> to vector<16x128xf32>
    %5 = arith.addf %2, %4 : vector<16x128xf32>
    %cst_5 = arith.constant 0.000000e+00 : f32
    %6 = vector.broadcast %cst_5 : f32 to vector<16x128xf32>
    %7 = arith.maximumf %5, %6 : vector<16x128xf32>
    %c0_6 = arith.constant 0 : index
    %c0_7 = arith.constant 0 : index
    %8 = vector.load %arg4[%c0_6, %c0_7] : memref<128x128xf32, #tpu.memory_space<vmem>>, vector<128x128xf32>
    %cst_8 = arith.constant dense<0.000000e+00> : vector<16x128xf32>
    %9 = tpu.matmul %7, %8, %cst_8 {dimension_numbers = #tpu.dot_dimension_numbers<[1], [0], [0], [1], [0, 0, 1, 1], [], []>} : vector<16x128xf32>, vector<128x128xf32>, vector<16x128xf32> -> vector<16x128xf32>
    %c0_9 = arith.constant 0 : index
    %c0_10 = arith.constant 0 : index
    %10 = vector.load %arg5[%c0_9, %c0_10] : memref<1x128xf32, #tpu.memory_space<vmem>>, vector<1x128xf32>
    %11 = vector.broadcast %10 : vector<1x128xf32> to vector<16x128xf32>
    %12 = arith.addf %9, %11 : vector<16x128xf32>
    %c0_11 = arith.constant 0 : index
    %c0_12 = arith.constant 0 : index
    %13 = vector.load %arg6[%c0_11, %c0_12] : memref<16x128xf32, #tpu.memory_space<vmem>>, vector<16x128xf32>
    tpu.vector_store %arg6[%c0_11, %c0_12], %12 {strides = array<i32>} : memref<16x128xf32, #tpu.memory_space<vmem>>, vector<16x128xf32>,
    return
  }
  func.func @transform_0(%arg0: i32) -> (i32, i32) {
    %c0_i32 = arith.constant 0 : i32
    %c0_i32_0 = arith.constant 0 : i32
    return %arg0, %c0_i32 : i32, i32
  }
  func.func @transform_1(%arg0: i32) -> (i32, i32) {
    %c0_i32 = arith.constant 0 : i32
    %c0_i32_0 = arith.constant 0 : i32
    %c0_i32_1 = arith.constant 0 : i32
    return %c0_i32, %c0_i32_0 : i32, i32
  }
  func.func @transform_2(%arg0: i32) -> (i32, i32) {
    %c0_i32 = arith.constant 0 : i32
    %c0_i32_0 = arith.constant 0 : i32
    %c0_i32_1 = arith.constant 0 : i32
    return %c0_i32, %c0_i32_0 : i32, i32
  }
  func.func @transform_3(%arg0: i32) -> (i32, i32) {
    %c0_i32 = arith.constant 0 : i32
    %c0_i32_0 = arith.constant 0 : i32
    %c0_i32_1 = arith.constant 0 : i32
    return %c0_i32, %c0_i32_0 : i32, i32
  }
  func.func @transform_4(%arg0: i32) -> (i32, i32) {
    %c0_i32 = arith.constant 0 : i32
    %c0_i32_0 = arith.constant 0 : i32
    %c0_i32_1 = arith.constant 0 : i32
    return %c0_i32, %c0_i32_0 : i32, i32
  }
  func.func @transform_5(%arg0: i32) -> (i32, i32) {
    %c0_i32 = arith.constant 0 : i32
    %c0_i32_0 = arith.constant 0 : i32
    return %arg0, %c0_i32 : i32, i32
  }
}

</mosaic_0001>

<llo_original>
// kernel: feed_forward.1
$region0: #{feed_forward.1}
  #allocation0 [shape = 'u32[]', space=smem, size = 0x4, offset = 0x4, fixed_abs, tag = 'smem constant byte address 0x4 - core index']
  #allocation1 [shape = 'u32[72,128]{1,0:T(1,128)}', space=vmem, size = 0x9000, scoped, tag = 'internal scratch']
  %s0 = inlined_call_operand.vmem [shape: f32[16,128], index: 0, kind: input, shape index: {}]
  %s1 = inlined_call_operand.vmem [shape: f32[128,128], index: 1, kind: input, shape index: {}]
  %s2 = inlined_call_operand.vmem [shape: f32[1,128], index: 2, kind: input, shape index: {}]
  %s3 = inlined_call_operand.vmem [shape: f32[128,128], index: 3, kind: input, shape index: {}]
  %s4 = inlined_call_operand.vmem [shape: f32[1,128], index: 4, kind: input, shape index: {}]
  %s5 = inlined_call_operand.vmem [shape: f32[16,128], index: 5, kind: output, shape index: {}]
  %s6 = sld [smem:[#allocation0]]
  $region30: #{feed_forward.1} parent=0
    _
  %s8 = ssub.s32 1, %s6
  %s9 = scalar_select 0, %s8, %s6
  // Predicated region
  $region2: #{feed_forward.1} parent=0 // pred_check
    _
  $region3: #{feed_forward.1} parent=0 // pred_check_branch
    %11 = sbr.rel (0) target = $region5
  $region4: #{feed_forward.1} parent=0 // pred_region
    _
  $region5: #{feed_forward.1} parent=0 // pred_fallthru
    _
  // Predicated region
  $region6: #{feed_forward.1} parent=0 // pred_check
    _
  $region7: #{feed_forward.1} parent=0 // pred_check_branch
    %13 = sbr.rel (0) target = $region9
  $region8: #{feed_forward.1} parent=0 // pred_region
    _
  $region9: #{feed_forward.1} parent=0 // pred_fallthru
    _
  // Predicated region
  $region10: #{feed_forward.1} parent=0 // pred_check
    _
  $region11: #{feed_forward.1} parent=0 // pred_check_branch
    %15 = sbr.rel (0) target = $region13
  $region12: #{feed_forward.1} parent=0 // pred_region
    _
  $region13: #{feed_forward.1} parent=0 // pred_fallthru
    _
  // Predicated region
  $region14: #{feed_forward.1} parent=0 // pred_check
    _
  $region15: #{feed_forward.1} parent=0 // pred_check_branch
    %17 = sbr.rel (0) target = $region17
  $region16: #{feed_forward.1} parent=0 // pred_region
    _
  $region17: #{feed_forward.1} parent=0 // pred_fallthru
    _
  // Predicated region
  $region18: #{feed_forward.1} parent=0 // pred_check
    _
  $region19: #{feed_forward.1} parent=0 // pred_check_branch
    %19 = sbr.rel (0) target = $region21
  $region20: #{feed_forward.1} parent=0 // pred_region
    _
  $region21: #{feed_forward.1} parent=0 // pred_fallthru
    _
  %v20 = vld [vmem:[%s0] sm:$0xff]
  %v21 = vld [vmem:[%s0 + $0x8] sm:$0xff]
  %v22 = vld [vmem:[%s1] sm:$0xff]
  %v23 = vld [vmem:[%s1 + $0x8] sm:$0xff]
  %v24 = vld [vmem:[%s1 + $0x10] sm:$0xff]
  %v25 = vld [vmem:[%s1 + $0x18] sm:$0xff]
  %v26 = vld [vmem:[%s1 + $0x20] sm:$0xff]
  %v27 = vld [vmem:[%s1 + $0x28] sm:$0xff]
  %v28 = vld [vmem:[%s1 + $0x30] sm:$0xff]
  %v29 = vld [vmem:[%s1 + $0x38] sm:$0xff]
  %v30 = vld [vmem:[%s1 + $0x40] sm:$0xff]
  %v31 = vld [vmem:[%s1 + $0x48] sm:$0xff]
  %v32 = vld [vmem:[%s1 + $0x50] sm:$0xff]
  %v33 = vld [vmem:[%s1 + $0x58] sm:$0xff]
  %v34 = vld [vmem:[%s1 + $0x60] sm:$0xff]
  %v35 = vld [vmem:[%s1 + $0x68] sm:$0xff]
  %v36 = vld [vmem:[%s1 + $0x70] sm:$0xff]
  %v37 = vld [vmem:[%s1 + $0x78] sm:$0xff]
  %v38 = vld [vmem:[%s2] sm:$0x1]
  %v40 = vperm.slane %v38, 0
  %42 = vmatpush.msra.mxu0 %v37
  %43 = vmatpush.msra.mxu0 %v36
  %44 = vmatpush.msra.mxu0 %v35
  %45 = vmatpush.msra.mxu0 %v34
  %46 = vmatpush.msra.mxu0 %v33
  %47 = vmatpush.msra.mxu0 %v32
  %48 = vmatpush.msra.mxu0 %v31
  %49 = vmatpush.msra.mxu0 %v30
  %50 = vmatpush.msra.mxu0 %v29
  %51 = vmatpush.msra.mxu0 %v28
  %52 = vmatpush.msra.mxu0 %v27
  %53 = vmatpush.msra.mxu0 %v26
  %54 = vmatpush.msra.mxu0 %v25
  %55 = vmatpush.msra.mxu0 %v24
  %56 = vmatpush.msra.mxu0 %v23
  %57 = vmatpush.msra.mxu0 %v22
  %58 = vmatmul.f32.gmra.mxu0 %v20
  %v59 = vpop.f32.mrf.mxu0
  %v60 = vadd.f32 %v40, %v59
  %61 = vmatmul.f32.gmra.mxu0 %v21
  %v62 = vpop.f32.mrf.mxu0
  %v63 = vadd.f32 %v40, %v62
  %64 = vdwg.mxu0
  %v65 = vmax.f32 %v60, 0.0
  %v66 = vmax.f32 %v63, 0.0
  %v67 = vld [vmem:[%s3] sm:$0xff]
  %v68 = vld [vmem:[%s3 + $0x8] sm:$0xff]
  %v69 = vld [vmem:[%s3 + $0x10] sm:$0xff]
  %v70 = vld [vmem:[%s3 + $0x18] sm:$0xff]
  %v71 = vld [vmem:[%s3 + $0x20] sm:$0xff]
  %v72 = vld [vmem:[%s3 + $0x28] sm:$0xff]
  %v73 = vld [vmem:[%s3 + $0x30] sm:$0xff]
  %v74 = vld [vmem:[%s3 + $0x38] sm:$0xff]
  %v75 = vld [vmem:[%s3 + $0x40] sm:$0xff]
  %v76 = vld [vmem:[%s3 + $0x48] sm:$0xff]
  %v77 = vld [vmem:[%s3 + $0x50] sm:$0xff]
  %v78 = vld [vmem:[%s3 + $0x58] sm:$0xff]
  %v79 = vld [vmem:[%s3 + $0x60] sm:$0xff]
  %v80 = vld [vmem:[%s3 + $0x68] sm:$0xff]
  %v81 = vld [vmem:[%s3 + $0x70] sm:$0xff]
  %v82 = vld [vmem:[%s3 + $0x78] sm:$0xff]
  %v83 = vld [vmem:[%s4] sm:$0x1]
  %v85 = vperm.slane %v83, 0
  %87 = vmatpush.msra.mxu0 %v82
  %88 = vmatpush.msra.mxu0 %v81
  %89 = vmatpush.msra.mxu0 %v80
  %90 = vmatpush.msra.mxu0 %v79
  %91 = vmatpush.msra.mxu0 %v78
  %92 = vmatpush.msra.mxu0 %v77
  %93 = vmatpush.msra.mxu0 %v76
  %94 = vmatpush.msra.mxu0 %v75
  %95 = vmatpush.msra.mxu0 %v74
  %96 = vmatpush.msra.mxu0 %v73
  %97 = vmatpush.msra.mxu0 %v72
  %98 = vmatpush.msra.mxu0 %v71
  %99 = vmatpush.msra.mxu0 %v70
  %100 = vmatpush.msra.mxu0 %v69
  %101 = vmatpush.msra.mxu0 %v68
  %102 = vmatpush.msra.mxu0 %v67
  %103 = vmatmul.f32.gmra.mxu0 %v65
  %v104 = vpop.f32.mrf.mxu0
  %v105 = vadd.f32 %v85, %v104
  %106 = vmatmul.f32.gmra.mxu0 %v66
  %v107 = vpop.f32.mrf.mxu0
  %v108 = vadd.f32 %v85, %v107
  %109 = vdwg.mxu0
  %110 = vst [vmem:[%s5] sm:$0xff] %v105
  %111 = vst [vmem:[%s5 + $0x8] sm:$0xff] %v108
  // Predicated region
  $region22: #{feed_forward.1} parent=0 // pred_check
    _
  $region23: #{feed_forward.1} parent=0 // pred_check_branch
    %113 = sbr.rel (0) target = $region25
  $region24: #{feed_forward.1} parent=0 // pred_region
    _
  $region25: #{feed_forward.1} parent=0 // pred_fallthru
    _
  // Predicated region
  $region26: #{feed_forward.1} parent=0 // pred_check
    _
  $region27: #{feed_forward.1} parent=0 // pred_check_branch
    %115 = sbr.rel (0) target = $region29
  $region28: #{feed_forward.1} parent=0 // pred_region
    _
  $region29: #{feed_forward.1} parent=0 // pred_fallthru
    _

</llo_original>
